<compile_context>
chip_gen: v6e
topology: v6e:2x2x1
jax: 0.10.0
libtpu: 0.0.40
codegen_flags: <defaults>
</compile_context>

<pallas_src>
import functools

import jax
import jax.numpy as jnp
from jax.experimental import pallas as pl
from jax.experimental.pallas import tpu as pltpu


def _round_up(x, m):
    return (x + m - 1) // m * m


def _choose_tile(b, block_batch):
    """Batch tile size. Full-extent for small B; >=2 lane-dense tiles otherwise."""
    if b <= 256:
        return b                                   # single tile, block == array dims
    tb = _round_up(pl.cdiv(b, 2), 128)             # >=2 tiles, multiple of 128 lanes
    return min(_round_up(block_batch, 128), tb)


# ---------------------------------------------------------------------------
# Kernel
# ---------------------------------------------------------------------------
def actor_critic_kernel(x_ref, w1_ref, w2_ref, b12_ref, wht_ref, bh_ref, out_ref):
    """One batch tile of the fused actor-critic forward.

    x_ref  : [TB, input_size]   f32  (cast to bf16 in-kernel)
    w1_ref : [input_size, H]    bf16
    w2_ref : [H, H]             bf16
    b12_ref: [2, H]             f32  (row 0 = b1, row 1 = b2)
    wht_ref: [8, H]             bf16 (rows 0..3 actor, row 4 critic, rest 0)
    bh_ref : [8, 1]             f32
    out_ref: [8, TB]            f32  (transposed compact head output)
    """
    bf16 = w1_ref.dtype
    x = x_ref[...].astype(bf16)
    b12 = b12_ref[...]

    # shared[0]: Linear(input -> hidden) + ReLU   (f32 accumulate / bias / relu)
    h1 = jnp.dot(x, w1_ref[...], preferred_element_type=jnp.float32) + b12[0:1, :]
    h1 = jnp.maximum(h1, 0.0).astype(bf16)

    # shared[2]: Linear(hidden -> hidden) + ReLU
    h2 = jnp.dot(h1, w2_ref[...], preferred_element_type=jnp.float32) + b12[1:2, :]
    h2 = jnp.maximum(h2, 0.0).astype(bf16)

    # fused actor + critic heads, emitted transposed: [8, TB]
    # NT pattern: contract dim 1 of wht [8, H] with dim 1 of h2 [TB, H].
    out_t = jax.lax.dot_general(
        wht_ref[...], h2, (((1,), (1,)), ((), ())),
        preferred_element_type=jnp.float32)
    out_ref[...] = out_t + bh_ref[...]


# ---------------------------------------------------------------------------
# Wrapper (jitted; out_size / block_batch are static)
# ---------------------------------------------------------------------------
@functools.partial(jax.jit, static_argnames=("out_size", "block_batch"))
def actor_critic_forward(x, params, *, out_size=4, block_batch=2048):
    """x: [B, input_size] float32. params: output of pack_params(). Returns (logits, value)."""
    x = jnp.asarray(x, jnp.float32)
    B, input_size = x.shape
    n_pad = params["wh_t"].shape[0]                # 8 (out_size + 1 padded to sublanes)

    tb = _choose_tile(B, block_batch)
    grid = pl.cdiv(B, tb)                          # ragged last block handled by Pallas

    def const(a):
        return pl.BlockSpec(a.shape, lambda i: (0,) * a.ndim)   # resident across tiles

    out_t = pl.pallas_call(
        actor_critic_kernel,
        out_shape=jax.ShapeDtypeStruct((n_pad, B), jnp.float32),
        grid=(grid,),
        in_specs=[
            pl.BlockSpec((tb, input_size), lambda i: (i, 0)),    # x tiles over batch
            const(params["w1"]),
            const(params["w2"]),
            const(params["b12"]),
            const(params["wh_t"]),
            const(params["bh"]),
        ],
        out_specs=pl.BlockSpec((n_pad, tb), lambda i: (0, i)),   # lane = batch (dense)
        compiler_params=pltpu.CompilerParams(
            dimension_semantics=("parallel",)),                  # megacore on v7x
    )(x, params["w1"], params["w2"], params["b12"], params["wh_t"], params["bh"])

    # Tiny slices on the compact [8, B] output (fused under the same jit).
    logits = out_t[:out_size, :].T                 # [B, out_size]
    value = out_t[out_size:out_size + 1, :].T      # [B, 1]
    return logits, value


# ---------------------------------------------------------------------------
# Parameter init / packing
# ---------------------------------------------------------------------------
def init_params(key, input_size=21, hidden_size=64, output_size=4):
    """PyTorch nn.Linear default init: U[-1/sqrt(fan_in), 1/sqrt(fan_in)]."""
    ks = jax.random.split(key, 8)

    def lin(kw, kb, fan_in, fan_out):
        bound = 1.0 / jnp.sqrt(jnp.float32(fan_in))
        w = jax.random.uniform(kw, (fan_in, fan_out), jnp.float32, -bound, bound)
        b = jax.random.uniform(kb, (fan_out,), jnp.float32, -bound, bound)
        return w, b

    w1, b1 = lin(ks[0], ks[1], input_size, hidden_size)
    w2, b2 = lin(ks[2], ks[3], hidden_size, hidden_size)
    wa, ba = lin(ks[4], ks[5], hidden_size, output_size)
    wc, bc = lin(ks[6], ks[7], hidden_size, 1)
    return dict(w1=w1, b1=b1, w2=w2, b2=b2, wa=wa, ba=ba, wc=wc, bc=bc)


def pack_params(p, compute_dtype=jnp.bfloat16):
    """Pre-cast weights to bf16 and fuse actor/critic heads into one
    pre-transposed [8, hidden] slab (rows 0..3 actor, row 4 critic, rest 0)."""
    hidden = p["w1"].shape[1]
    out_size = p["wa"].shape[1]
    n_pad = _round_up(out_size + 1, 8)

    wh_t = jnp.zeros((n_pad, hidden), jnp.float32)
    wh_t = wh_t.at[:out_size, :].set(p["wa"].T)
    wh_t = wh_t.at[out_size, :].set(p["wc"][:, 0])

    bh = jnp.zeros((n_pad, 1), jnp.float32)
    bh = bh.at[:out_size, 0].set(p["ba"])
    bh = bh.at[out_size, 0].set(p["bc"][0])

    b12 = jnp.stack([p["b1"], p["b2"]], axis=0).astype(jnp.float32)  # [2, hidden]

    return dict(w1=p["w1"].astype(compute_dtype),
                w2=p["w2"].astype(compute_dtype),
                b12=b12,
                wh_t=wh_t.astype(compute_dtype),
                bh=bh)


# ---------------------------------------------------------------------------
# Reference (plain JAX, mirroring the kernel's bf16 storage casts)
# ---------------------------------------------------------------------------
def reference_forward(x, p, compute_dtype=jnp.bfloat16):
    c = lambda a: a.astype(compute_dtype).astype(jnp.float32)
    h1 = jnp.maximum(c(x) @ c(p["w1"]) + p["b1"][None, :], 0.0)
    h2 = jnp.maximum(c(h1) @ c(p["w2"]) + p["b2"][None, :], 0.0)
    h2 = c(h2)
    logits = h2 @ c(p["wa"]) + p["ba"][None, :]
    value = h2 @ c(p["wc"]) + p["bc"][None, :]
    return logits, value


if __name__ == "__main__":
    key = jax.random.PRNGKey(0)
    k_x, k_x2, k_p = jax.random.split(key, 3)

    B, input_size, hidden_size, output_size = 8, 21, 64, 4
    x = jax.random.normal(k_x, (B, input_size), jnp.float32)
    params = init_params(k_p, input_size, hidden_size, output_size)
    packed = pack_params(params)

    # Small batch (single full-extent tile).
    logits, value = actor_critic_forward(x, packed, out_size=output_size)
    jax.block_until_ready((logits, value))

    ref_logits, ref_value = reference_forward(x, params)
    assert logits.shape == (B, output_size) and value.shape == (B, 1)
    assert jnp.allclose(logits, ref_logits, atol=1e-2, rtol=1e-2)
    assert jnp.allclose(value, ref_value, atol=1e-2, rtol=1e-2)

    # Larger, non-tile-multiple batch: exercises the multi-tile grid with a
    # ragged (Pallas-masked) last block and lane-dense transposed output.
    B2 = 300
    x2 = jax.random.normal(k_x2, (B2, input_size), jnp.float32)
    logits2, value2 = actor_critic_forward(x2, packed, out_size=output_size)
    jax.block_until_ready((logits2, value2))
    ref_logits2, ref_value2 = reference_forward(x2, params)
    assert logits2.shape == (B2, output_size) and value2.shape == (B2, 1)
    assert jnp.allclose(logits2, ref_logits2, atol=1e-2, rtol=1e-2)
    assert jnp.allclose(value2, ref_value2, atol=1e-2, rtol=1e-2)

    print("KERNEL_OK")
</pallas_src>

<mosaic_0001>
module attributes {stable_mosaic.version = 11 : i64} {
  func.func @actor_critic_kernel(%arg0: i32, %arg1: memref<8x21xf32, #tpu.memory_space<vmem>>, %arg2: memref<21x64xbf16, #tpu.memory_space<vmem>>, %arg3: memref<64x64xbf16, #tpu.memory_space<vmem>>, %arg4: memref<2x64xf32, #tpu.memory_space<vmem>>, %arg5: memref<8x64xbf16, #tpu.memory_space<vmem>>, %arg6: memref<8x1xf32, #tpu.memory_space<vmem>>, %arg7: memref<8x8xf32, #tpu.memory_space<vmem>>) attributes {dimension_semantics = [#tpu.dimension_semantics<parallel>], iteration_bounds = array<i64: 1>, scalar_prefetch = 0 : i64, scratch_operands = 0 : i64, tpu.core_type = #tpu.core_type<tc>, window_params = [{transform_indices = @transform_0, window_bounds = array<i64: 8, 21>}, {pipeline_mode = #tpu.pipeline_mode<synchronous>, transform_indices = @transform_1, window_bounds = array<i64: 21, 64>}, {pipeline_mode = #tpu.pipeline_mode<synchronous>, transform_indices = @transform_2, window_bounds = array<i64: 64, 64>}, {pipeline_mode = #tpu.pipeline_mode<synchronous>, transform_indices = @transform_3, window_bounds = array<i64: 2, 64>}, {pipeline_mode = #tpu.pipeline_mode<synchronous>, transform_indices = @transform_4, window_bounds = array<i64: 8, 64>}, {pipeline_mode = #tpu.pipeline_mode<synchronous>, transform_indices = @transform_5, window_bounds = array<i64: 8, 1>}, {transform_indices = @transform_6, window_bounds = array<i64: 8, 8>}]} {
    %c0 = arith.constant 0 : index
    %c0_0 = arith.constant 0 : index
    %0 = vector.load %arg1[%c0, %c0_0] : memref<8x21xf32, #tpu.memory_space<vmem>>, vector<8x21xf32>
    %1 = arith.truncf %0 : vector<8x21xf32> to vector<8x21xbf16>
    %c0_1 = arith.constant 0 : index
    %c0_2 = arith.constant 0 : index
    %2 = vector.load %arg4[%c0_1, %c0_2] : memref<2x64xf32, #tpu.memory_space<vmem>>, vector<2x64xf32>
    %c0_3 = arith.constant 0 : index
    %c0_4 = arith.constant 0 : index
    %3 = vector.load %arg2[%c0_3, %c0_4] : memref<21x64xbf16, #tpu.memory_space<vmem>>, vector<21x64xbf16>
    %cst = arith.constant dense<0.000000e+00> : vector<8x64xf32>
    %4 = tpu.matmul %1, %3, %cst {dimension_numbers = #tpu.dot_dimension_numbers<[1], [0], [0], [1], [0, 0, 1, 1], [], []>} : vector<8x21xbf16>, vector<21x64xbf16>, vector<8x64xf32> -> vector<8x64xf32>
    %5 = vector.extract_strided_slice %2 {offsets = [0, 0], sizes = [1, 64], strides = [1, 1]} : vector<2x64xf32> to vector<1x64xf32>
    %6 = vector.broadcast %5 : vector<1x64xf32> to vector<8x64xf32>
    %7 = arith.addf %4, %6 : vector<8x64xf32>
    %cst_5 = arith.constant 0.000000e+00 : f32
    %8 = vector.broadcast %cst_5 : f32 to vector<8x64xf32>
    %9 = arith.maximumf %7, %8 : vector<8x64xf32>
    %10 = arith.truncf %9 : vector<8x64xf32> to vector<8x64xbf16>
    %c0_6 = arith.constant 0 : index
    %c0_7 = arith.constant 0 : index
    %11 = vector.load %arg3[%c0_6, %c0_7] : memref<64x64xbf16, #tpu.memory_space<vmem>>, vector<64x64xbf16>
    %cst_8 = arith.constant dense<0.000000e+00> : vector<8x64xf32>
    %12 = tpu.matmul %10, %11, %cst_8 {dimension_numbers = #tpu.dot_dimension_numbers<[1], [0], [0], [1], [0, 0, 1, 1], [], []>} : vector<8x64xbf16>, vector<64x64xbf16>, vector<8x64xf32> -> vector<8x64xf32>
    %13 = vector.extract_strided_slice %2 {offsets = [1, 0], sizes = [1, 64], strides = [1, 1]} : vector<2x64xf32> to vector<1x64xf32>
    %14 = vector.broadcast %13 : vector<1x64xf32> to vector<8x64xf32>
    %15 = arith.addf %12, %14 : vector<8x64xf32>
    %cst_9 = arith.constant 0.000000e+00 : f32
    %16 = vector.broadcast %cst_9 : f32 to vector<8x64xf32>
    %17 = arith.maximumf %15, %16 : vector<8x64xf32>
    %18 = arith.truncf %17 : vector<8x64xf32> to vector<8x64xbf16>
    %c0_10 = arith.constant 0 : index
    %c0_11 = arith.constant 0 : index
    %19 = vector.load %arg5[%c0_10, %c0_11] : memref<8x64xbf16, #tpu.memory_space<vmem>>, vector<8x64xbf16>
    %cst_12 = arith.constant dense<0.000000e+00> : vector<8x8xf32>
    %20 = tpu.matmul %19, %18, %cst_12 {dimension_numbers = #tpu.dot_dimension_numbers<[1], [1], [0], [0], [0, 0, 1, 0], [], []>} : vector<8x64xbf16>, vector<8x64xbf16>, vector<8x8xf32> -> vector<8x8xf32>
    %c0_13 = arith.constant 0 : index
    %c0_14 = arith.constant 0 : index
    %21 = vector.load %arg6[%c0_13, %c0_14] : memref<8x1xf32, #tpu.memory_space<vmem>>, vector<8x1xf32>
    %22 = vector.broadcast %21 : vector<8x1xf32> to vector<8x8xf32>
    %23 = arith.addf %20, %22 : vector<8x8xf32>
    %c0_15 = arith.constant 0 : index
    %c0_16 = arith.constant 0 : index
    %24 = vector.load %arg7[%c0_15, %c0_16] : memref<8x8xf32, #tpu.memory_space<vmem>>, vector<8x8xf32>
    tpu.vector_store %arg7[%c0_15, %c0_16], %23 {strides = array<i32>} : memref<8x8xf32, #tpu.memory_space<vmem>>, vector<8x8xf32>,
    return
  }
  func.func @transform_0(%arg0: i32) -> (i32, i32) {
    %c0_i32 = arith.constant 0 : i32
    %c0_i32_0 = arith.constant 0 : i32
    return %arg0, %c0_i32 : i32, i32
  }
  func.func @transform_1(%arg0: i32) -> (i32, i32) {
    %c0_i32 = arith.constant 0 : i32
    %c0_i32_0 = arith.constant 0 : i32
    %c0_i32_1 = arith.constant 0 : i32
    return %c0_i32, %c0_i32_0 : i32, i32
  }
  func.func @transform_2(%arg0: i32) -> (i32, i32) {
    %c0_i32 = arith.constant 0 : i32
    %c0_i32_0 = arith.constant 0 : i32
    %c0_i32_1 = arith.constant 0 : i32
    return %c0_i32, %c0_i32_0 : i32, i32
  }
  func.func @transform_3(%arg0: i32) -> (i32, i32) {
    %c0_i32 = arith.constant 0 : i32
    %c0_i32_0 = arith.constant 0 : i32
    %c0_i32_1 = arith.constant 0 : i32
    return %c0_i32, %c0_i32_0 : i32, i32
  }
  func.func @transform_4(%arg0: i32) -> (i32, i32) {
    %c0_i32 = arith.constant 0 : i32
    %c0_i32_0 = arith.constant 0 : i32
    %c0_i32_1 = arith.constant 0 : i32
    return %c0_i32, %c0_i32_0 : i32, i32
  }
  func.func @transform_5(%arg0: i32) -> (i32, i32) {
    %c0_i32 = arith.constant 0 : i32
    %c0_i32_0 = arith.constant 0 : i32
    %c0_i32_1 = arith.constant 0 : i32
    return %c0_i32, %c0_i32_0 : i32, i32
  }
  func.func @transform_6(%arg0: i32) -> (i32, i32) {
    %c0_i32 = arith.constant 0 : i32
    %c0_i32_0 = arith.constant 0 : i32
    return %c0_i32, %arg0 : i32, i32
  }
}

</mosaic_0001>

<llo_original>
// kernel: actor_critic_forward.1
$region0: #{actor_critic_forward.1}
  #allocation0 [shape = 'u32[]', space=smem, size = 0x4, offset = 0x4, fixed_abs, tag = 'smem constant byte address 0x4 - core index']
  #allocation1 [shape = 'u32[144,128]{1,0:T(1,128)}', space=vmem, size = 0x12000, scoped, tag = 'internal scratch']
  %s0 = inlined_call_operand.hbm [shape: f32[8,21], index: 0, kind: input, shape index: {}]
  %s1 = inlined_call_operand.vmem [shape: bf16[21,64], index: 1, kind: input, shape index: {}]
  %s2 = inlined_call_operand.hbm [shape: bf16[64,64], index: 2, kind: input, shape index: {}]
  %s3 = inlined_call_operand.hbm [shape: f32[2,64], index: 3, kind: input, shape index: {}]
  %s4 = inlined_call_operand.vmem [shape: bf16[8,64], index: 4, kind: input, shape index: {}]
  %s5 = inlined_call_operand.vmem [shape: f32[8,1], index: 5, kind: input, shape index: {}]
  %s6 = inlined_call_operand.vmem [shape: f32[8,8], index: 6, kind: output, shape index: {}]
  %s7 = sld [smem:[#allocation0]]
  $region46: #{actor_critic_forward.1} parent=0
    _
  %s9 = ssub.s32 1, %s7
  %s10 = scalar_select 0, %s9, %s7
  $region1: #{actor_critic_forward.1} parent=0
    #allocation2 [shape = 'u8[4096]{0}', space=vmem, size = 0x1000, scoped, tag = 'input window, operand 0, single buffered']
    #allocation3 [shape = 's32[1]{0}', space=sflag, size = 0x4, scoped, tag = 'scoped memory for actor_critic_forward.1']
    #allocation4 [shape = 'u8[16384]{0}', space=vmem, size = 0x4000, scoped, tag = 'input window, operand 2, single buffered']
    #allocation5 [shape = 's32[1]{0}', space=sflag, size = 0x4, scoped, tag = 'scoped memory for actor_critic_forward.1']
    #allocation6 [shape = 'u8[1024]{0}', space=vmem, size = 0x400, scoped, tag = 'input window, operand 3, single buffered']
    %11 = vsyncpa [#allocation3], 0
    %12 = vsyncpa [#allocation5], 0
    // Predicated region
    $region2: #{actor_critic_forward.1} parent=1 // pred_check
      _
    $region3: #{actor_critic_forward.1} parent=1 // pred_check_branch
      %14 = sbr.rel (0) target = $region5
    $region4: #{actor_critic_forward.1} parent=1 // pred_region
      %s16 = ssub.s32 128, 128
      %17 = vsyncadd [#allocation3], %s16
      %s19 = sshll.u32 [#allocation2], 4
      %s20 = int_to_ptr.vmem [resolvable:$true] %s19
      %22 = dma.hbm_to_vmem [thread:$0]  %s0, 128, %s20, [#allocation3]
    $region5: #{actor_critic_forward.1} parent=1 // pred_fallthru
      _
    // Predicated region
    $region6: #{actor_critic_forward.1} parent=1 // pred_check
      _
    $region7: #{actor_critic_forward.1} parent=1 // pred_check_branch
      %24 = sbr.rel (0) target = $region9
    $region8: #{actor_critic_forward.1} parent=1 // pred_region
      _
    $region9: #{actor_critic_forward.1} parent=1 // pred_fallthru
      _
    // Predicated region
    $region10: #{actor_critic_forward.1} parent=1 // pred_check
      _
    $region11: #{actor_critic_forward.1} parent=1 // pred_check_branch
      %26 = sbr.rel (0) target = $region13
    $region12: #{actor_critic_forward.1} parent=1 // pred_region
      %s28 = ssub.s32 512, 512
      %29 = vsyncadd [#allocation5], %s28
      %s30 = sshll.u32 [#allocation4], 4
      %s31 = int_to_ptr.vmem [resolvable:$true] %s30
      %36 = dma.hbm_to_vmem [thread:$0]  %s2, 512, %s31, [#allocation5], 64, 64, 4
    $region13: #{actor_critic_forward.1} parent=1 // pred_fallthru
      _
    // Predicated region
    $region14: #{actor_critic_forward.1} parent=1 // pred_check
      _
    $region15: #{actor_critic_forward.1} parent=1 // pred_check_branch
      %38 = sbr.rel (0) target = $region17
    $region16: #{actor_critic_forward.1} parent=1 // pred_region
      %s40 = ssub.s32 32, 32
      %41 = vsyncadd [#allocation5], %s40
      %s43 = sshll.u32 [#allocation6], 4
      %s44 = int_to_ptr.vmem [resolvable:$true] %s43
      %46 = dma.hbm_to_vmem [thread:$0]  %s3, 32, %s44, [#allocation5]
    $region17: #{actor_critic_forward.1} parent=1 // pred_fallthru
      _
    // Predicated region
    $region18: #{actor_critic_forward.1} parent=1 // pred_check
      _
    $region19: #{actor_critic_forward.1} parent=1 // pred_check_branch
      %48 = sbr.rel (0) target = $region21
    $region20: #{actor_critic_forward.1} parent=1 // pred_region
      _
    $region21: #{actor_critic_forward.1} parent=1 // pred_fallthru
      _
    // Predicated region
    $region22: #{actor_critic_forward.1} parent=1 // pred_check
      _
    $region23: #{actor_critic_forward.1} parent=1 // pred_check_branch
      %50 = sbr.rel (0) target = $region25
    $region24: #{actor_critic_forward.1} parent=1 // pred_region
      _
    $region25: #{actor_critic_forward.1} parent=1 // pred_fallthru
      _
    // Predicated region
    $region26: #{actor_critic_forward.1} parent=1 // pred_check
      _
    $region27: #{actor_critic_forward.1} parent=1 // pred_check_branch
      %52 = sbr.rel (0) target = $region29
    $region28: #{actor_critic_forward.1} parent=1 // pred_region
      %53 = dma.done [#allocation3], 128
    $region29: #{actor_critic_forward.1} parent=1 // pred_fallthru
      _
    // Predicated region
    $region30: #{actor_critic_forward.1} parent=1 // pred_check
      _
    $region31: #{actor_critic_forward.1} parent=1 // pred_check_branch
      %55 = sbr.rel (0) target = $region33
    $region32: #{actor_critic_forward.1} parent=1 // pred_region
      %56 = dma.done [#allocation5], 512
    $region33: #{actor_critic_forward.1} parent=1 // pred_fallthru
      _
    // Predicated region
    $region34: #{actor_critic_forward.1} parent=1 // pred_check
      _
    $region35: #{actor_critic_forward.1} parent=1 // pred_check_branch
      %58 = sbr.rel (0) target = $region37
    $region36: #{actor_critic_forward.1} parent=1 // pred_region
      %59 = dma.done [#allocation5], 32
    $region37: #{actor_critic_forward.1} parent=1 // pred_fallthru
      _
    %v61 = vld [vmem:[#allocation2] sm:$0xff]
    %v62 = vpack.c.bf16 %v61, %v61
    %v63 = vld [vmem:[#allocation6] sm:$0x3]
    %v64 = vld [vmem:[%s1] sm:$0xf]
    %v65 = vld [vmem:[%s1 + $0x4] sm:$0xf]
    %v66 = vld [vmem:[%s1 + $0x8] sm:$0x7]
    %v67 = vlaneseq
    %v68 = vshrl.u32 %v67, 7
    %v69 = vsub.s32 0, %v68
    %v70 = vrot.slane %v63, %v69
    %v74 = vunpack.c.l.b16 %v64
    %v75 = vunpack.c.l.b16 %v65
    %v76 = vunpack.c.l.b16 %v66
    %v77 = vpack.c.b16 %v75, %v74
    %v78 = vpack.c.b16 %v76, %v76
    %vm80 = vcmask 171008
    %v82 = vsel %vm80, %v62, 0
    %vm84 = vcmask 1041408
    %vm85 = vcmask 1042432
    %v86 = vsel %vm84, 4294967295, 65535
    %v87 = vsel %vm85, %v86, 0
    %v89 = vand.u32 %v78, %v87
    %91 = vmatprep.subr.bf16.mxu0 0
    %92 = vmatpush1.bf16.msra.mxu0 0
    %93 = vmatprep.subr.bf16.mxu0 0
    %94 = vmatpush1.bf16.msra.mxu0 0
    %95 = vmatprep.subr.bf16.mxu0 0
    %96 = vmatpush1.bf16.msra.mxu0 0
    %97 = vmatprep.subr.bf16.mxu0 0
    %98 = vmatpush1.bf16.msra.mxu0 0
    %99 = vmatprep.subr.bf16.mxu0 0
    %100 = vmatpush1.bf16.msra.mxu0 0
    %101 = vmatprep.subr.bf16.mxu0 0
    %102 = vmatpush1.bf16.msra.mxu0 0
    %103 = vmatprep.subr.bf16.mxu0 0
    %104 = vmatpush1.bf16.msra.mxu0 %v89
    %105 = vmatprep.subr.bf16.mxu0 0
    %106 = vmatpush1.bf16.msra.mxu0 %v77
    %107 = vmatprep.subr.bf16.mxu0 0
    %108 = vmatpush2.bf16.msra.mxu0 0
    %109 = vmatprep.subr.bf16.mxu0 0
    %110 = vmatpush2.bf16.msra.mxu0 0
    %111 = vmatprep.subr.bf16.mxu0 0
    %112 = vmatpush2.bf16.msra.mxu0 0
    %113 = vmatprep.subr.bf16.mxu0 0
    %114 = vmatpush2.bf16.msra.mxu0 0
    %115 = vmatprep.subr.bf16.mxu0 0
    %116 = vmatpush2.bf16.msra.mxu0 0
    %117 = vmatprep.subr.bf16.mxu0 0
    %118 = vmatpush2.bf16.msra.mxu0 0
    %119 = vmatprep.subr.bf16.mxu0 0
    %120 = vmatpush2.bf16.msra.mxu0 0
    %121 = vmatprep.subr.bf16.mxu0 0
    %122 = vmatpush2.bf16.msra.mxu0 0
    %123 = vmatprep.mubr.bf16.mxu0 0
    %124 = vmatmul.mubr.bf16.gmra.mxu0 %v82
    %v125 = vpop.f32.mrf.mxu0
    %v126 = vadd.f32 %v70, %v125
    %v127 = vpop.f32.mrf.mxu0
    %v128 = vpop.f32.mrf.mxu0
    %v129 = vpop.f32.mrf.mxu0
    %130 = vdwg.mxu0
    %v131 = vmax.f32 %v126, 0.0
    %v132 = vpack.c.bf16 %v131, %v131
    %v133 = vld [vmem:[#allocation4] sm:$0xf]
    %v134 = vld [vmem:[#allocation4 + $0x4] sm:$0xf]
    %v135 = vld [vmem:[#allocation4 + $0x8] sm:$0xf]
    %v136 = vld [vmem:[#allocation4 + $0xc] sm:$0xf]
    %v137 = vld [vmem:[#allocation4 + $0x10] sm:$0xf]
    %v138 = vld [vmem:[#allocation4 + $0x14] sm:$0xf]
    %v139 = vld [vmem:[#allocation4 + $0x18] sm:$0xf]
    %v140 = vld [vmem:[#allocation4 + $0x1c] sm:$0xf]
    %v141 = vlaneseq
    %v142 = vshrl.u32 %v141, 7
    %v143 = vsub.s32 1, %v142
    %v144 = vrot.slane %v63, %v143
    %v153 = vunpack.c.l.b16 %v133
    %v154 = vunpack.c.l.b16 %v134
    %v155 = vunpack.c.l.b16 %v135
    %v156 = vunpack.c.l.b16 %v136
    %v157 = vunpack.c.l.b16 %v137
    %v158 = vunpack.c.l.b16 %v138
    %v159 = vunpack.c.l.b16 %v139
    %v160 = vunpack.c.l.b16 %v140
    %v161 = vpack.c.b16 %v154, %v153
    %v162 = vpack.c.b16 %v156, %v155
    %v163 = vpack.c.b16 %v158, %v157
    %v164 = vpack.c.b16 %v160, %v159
    %vm169 = vcmask 523264
    %v171 = vsel %vm169, %v132, 0
    %173 = vmatprep.subr.bf16.mxu0 0
    %174 = vmatpush1.bf16.msra.mxu0 0
    %175 = vmatprep.subr.bf16.mxu0 0
    %176 = vmatpush1.bf16.msra.mxu0 0
    %177 = vmatprep.subr.bf16.mxu0 0
    %178 = vmatpush1.bf16.msra.mxu0 0
    %179 = vmatprep.subr.bf16.mxu0 0
    %180 = vmatpush1.bf16.msra.mxu0 0
    %181 = vmatprep.subr.bf16.mxu0 0
    %182 = vmatpush1.bf16.msra.mxu0 %v164
    %183 = vmatprep.subr.bf16.mxu0 0
    %184 = vmatpush1.bf16.msra.mxu0 %v163
    %185 = vmatprep.subr.bf16.mxu0 0
    %186 = vmatpush1.bf16.msra.mxu0 %v162
    %187 = vmatprep.subr.bf16.mxu0 0
    %188 = vmatpush1.bf16.msra.mxu0 %v161
    %189 = vmatprep.subr.bf16.mxu0 0
    %190 = vmatpush2.bf16.msra.mxu0 0
    %191 = vmatprep.subr.bf16.mxu0 0
    %192 = vmatpush2.bf16.msra.mxu0 0
    %193 = vmatprep.subr.bf16.mxu0 0
    %194 = vmatpush2.bf16.msra.mxu0 0
    %195 = vmatprep.subr.bf16.mxu0 0
    %196 = vmatpush2.bf16.msra.mxu0 0
    %197 = vmatprep.subr.bf16.mxu0 0
    %198 = vmatpush2.bf16.msra.mxu0 0
    %199 = vmatprep.subr.bf16.mxu0 0
    %200 = vmatpush2.bf16.msra.mxu0 0
    %201 = vmatprep.subr.bf16.mxu0 0
    %202 = vmatpush2.bf16.msra.mxu0 0
    %203 = vmatprep.subr.bf16.mxu0 0
    %204 = vmatpush2.bf16.msra.mxu0 0
    %205 = vmatprep.mubr.bf16.mxu0 0
    %206 = vmatmul.mubr.bf16.gmra.mxu0 %v171
    %v207 = vpop.f32.mrf.mxu0
    %v208 = vadd.f32 %v144, %v207
    %v209 = vpop.f32.mrf.mxu0
    %v210 = vpop.f32.mrf.mxu0
    %v211 = vpop.f32.mrf.mxu0
    %212 = vdwg.mxu0
    %v213 = vmax.f32 %v208, 0.0
    %v214 = vpack.c.bf16 %v213, %v213
    %v215 = vld [vmem:[%s4] sm:$0xf]
    %v216 = vld [vmem:[%s5] sm:$0xff]
    %218 = vset.pattern.permute.xlu0 0
    %219 = vperm.xlu0 %218, %v216
    %v220 = vpop.permute.xlu0 %219
    %v223 = vsel %vm169, %v215, 0
    %v226 = vsel %vm169, %v214, 0
    %228 = vmatprep.subr.bf16.mxu0 0
    %229 = vmatpush1.bf16.xpose.msra.mxu0 0
    %230 = vmatprep.subr.bf16.mxu0 0
    %231 = vmatpush1.bf16.xpose.msra.mxu0 0
    %232 = vmatprep.subr.bf16.mxu0 0
    %233 = vmatpush1.bf16.xpose.msra.mxu0 0
    %234 = vmatprep.subr.bf16.mxu0 0
    %235 = vmatpush1.bf16.xpose.msra.mxu0 0
    %236 = vmatprep.subr.bf16.mxu0 0
    %237 = vmatpush1.bf16.xpose.msra.mxu0 0
    %238 = vmatprep.subr.bf16.mxu0 0
    %239 = vmatpush1.bf16.xpose.msra.mxu0 0
    %240 = vmatprep.subr.bf16.mxu0 0
    %241 = vmatpush1.bf16.xpose.msra.mxu0 0
    %242 = vmatprep.subr.bf16.mxu0 0
    %243 = vmatpush1.bf16.xpose.msra.mxu0 %v226
    %244 = vmatprep.subr.bf16.mxu0 0
    %245 = vmatpush2.bf16.xpose.msra.mxu0 0
    %246 = vmatprep.subr.bf16.mxu0 0
    %247 = vmatpush2.bf16.xpose.msra.mxu0 0
    %248 = vmatprep.subr.bf16.mxu0 0
    %249 = vmatpush2.bf16.xpose.msra.mxu0 0
    %250 = vmatprep.subr.bf16.mxu0 0
    %251 = vmatpush2.bf16.xpose.msra.mxu0 0
    %252 = vmatprep.subr.bf16.mxu0 0
    %253 = vmatpush2.bf16.xpose.msra.mxu0 0
    %254 = vmatprep.subr.bf16.mxu0 0
    %255 = vmatpush2.bf16.xpose.msra.mxu0 0
    %256 = vmatprep.subr.bf16.mxu0 0
    %257 = vmatpush2.bf16.xpose.msra.mxu0 0
    %258 = vmatprep.subr.bf16.mxu0 0
    %259 = vmatpush2.bf16.xpose.msra.mxu0 0
    %260 = vmatprep.mubr.bf16.mxu0 0
    %261 = vmatmul.mubr.bf16.gmra.mxu0 %v223
    %v262 = vpop.f32.mrf.mxu0
    %v263 = vadd.f32 %v220, %v262
    %v264 = vpop.f32.mrf.mxu0
    %v265 = vpop.f32.mrf.mxu0
    %v266 = vpop.f32.mrf.mxu0
    %267 = vdwg.mxu0
    %vm268 = vcmask 64512
    %269 = vst.msk [vmem:[%s6] sm:$0xff] %vm268, %v263
    // Predicated region
    $region38: #{actor_critic_forward.1} parent=1 // pred_check
      _
    $region39: #{actor_critic_forward.1} parent=1 // pred_check_branch
      %271 = sbr.rel (0) target = $region41
    $region40: #{actor_critic_forward.1} parent=1 // pred_region
      _
    $region41: #{actor_critic_forward.1} parent=1 // pred_fallthru
      _
    // Predicated region
    $region42: #{actor_critic_forward.1} parent=1 // pred_check
      _
    $region43: #{actor_critic_forward.1} parent=1 // pred_check_branch
      %273 = sbr.rel (0) target = $region45
    $region44: #{actor_critic_forward.1} parent=1 // pred_region
      _
    $region45: #{actor_critic_forward.1} parent=1 // pred_fallthru
      _
    %274 = vsyncpa [#allocation3], 1
    %275 = vsyncpa [#allocation5], 1

</llo_original>
